<compile_context>
chip_gen: v7x
topology: tpu7x:2x2x1
jax: 0.10.0
libtpu: 0.0.40
codegen_flags: <defaults>
</compile_context>

<pallas_src>
import math

import jax
import jax.numpy as jnp
from jax.experimental import pallas as pl
from jax.experimental.pallas import tpu as pltpu

# ----------------------------- config ---------------------------------------
B, T = 2, 8
N_EMBD = 32
N_HEAD = 4
N_QUERY_GROUPS = 2
HEAD_SIZE = N_EMBD // N_HEAD            # 8
Q_PER_KV = N_HEAD // N_QUERY_GROUPS     # 2
Q_DIM = N_HEAD * HEAD_SIZE              # 32
KV_DIM = N_QUERY_GROUPS * HEAD_SIZE     # 16
QKV_DIM = Q_DIM + 2 * KV_DIM            # 64
INTERMEDIATE = 64                       # MLP intermediate size
EPS = 1e-5
ROPE_BASE = 10000.0


# ----------------------------- kernel 1: norm_1 + fused QKV ------------------
def norm_qkv_kernel(x_ref, wn1_ref, wqkv_ref, qkv_ref):
    """RMSNorm(x) @ W_qkv on the collapsed (B*T, C) slab (bf16 MXU, f32 accum)."""
    x = x_ref[...]                                          # (BT, C) f32
    n1 = x * jax.lax.rsqrt(jnp.mean(x * x, axis=-1, keepdims=True) + EPS)
    n1 = n1 * wn1_ref[...]
    qkv_ref[...] = jnp.dot(n1.astype(jnp.bfloat16), wqkv_ref[...],
                           preferred_element_type=jnp.float32
                           ).astype(qkv_ref.dtype)


# ----------------------------- kernel 2: GQA causal attention ----------------
def gqa_attn_kernel(cos_q_ref, sin_q_ref, cos_k_ref, sin_k_ref,
                    q_ref, k_ref, v_ref, o_ref):
    """Causal attention for one (batch, query-group) pair.

    q_ref : (q_per_kv*T, hs) — the group's query heads folded into the rows.
    k_ref / v_ref : (T, hs)  — the group's shared K/V (no GQA replication).
    Softmax scale 1/sqrt(hs) is pre-folded into the Q weight columns.
    """
    f32, bf16 = jnp.float32, jnp.bfloat16
    hs = q_ref.shape[-1]
    half = hs // 2
    t_kv = k_ref.shape[0]
    p_per_kv = q_ref.shape[0] // t_kv

    def rope(t, cos_t, sin_t):
        # rotate-half with full-width cos / sign-folded sin tables.
        # TODO(synk): at production head_size (lane multiple of 128) use
        #             pltpu.roll(t, half, axis=-1) instead of slice+concat.
        rot = jnp.concatenate([t[:, half:], t[:, :half]], axis=-1)
        return t * cos_t + rot * sin_t

    q = rope(q_ref[...].astype(f32), cos_q_ref[...], sin_q_ref[...])
    k = rope(k_ref[...].astype(f32), cos_k_ref[...], sin_k_ref[...])

    # scores: (q_per_kv*T, T) — single matmul, batch NOT collapsed in attention.
    s = jnp.einsum('qd,kd->qk', q.astype(bf16), k.astype(bf16),
                   preferred_element_type=f32)

    # causal mask broadcast per query head (leading-dim reshape only).
    row = jax.lax.broadcasted_iota(jnp.int32, (t_kv, t_kv), 0)
    col = jax.lax.broadcasted_iota(jnp.int32, (t_kv, t_kv), 1)
    causal = row >= col
    s3 = s.reshape(p_per_kv, t_kv, t_kv)
    # -1e30 fill is safe: the diagonal is always unmasked (no 0/0 rows).
    s3 = jnp.where(causal[None], s3, jnp.float32(-1e30))

    s3 = s3 - jnp.max(s3, axis=-1, keepdims=True)
    p3 = jnp.exp(s3)
    l_inv = pl.reciprocal(jnp.sum(p3, axis=-1, keepdims=True), approx=True)

    p = p3.reshape(p_per_kv * t_kv, t_kv)
    y = jnp.dot(p.astype(bf16), v_ref[...], preferred_element_type=f32)
    y = y * l_inv.reshape(p_per_kv * t_kv, 1)
    o_ref[...] = y.astype(o_ref.dtype)


# ----------------------------- kernel 3: proj + residual + MLP ---------------
def proj_mlp_kernel(x_ref, y_ref, wproj_ref, wn2_ref, wfc12_ref, wmproj_ref,
                    o_ref):
    f32, bf16 = jnp.float32, jnp.bfloat16
    inter = wfc12_ref.shape[-1] // 2

    # attn.proj + first residual
    x = x_ref[...] + jnp.dot(y_ref[...], wproj_ref[...],
                             preferred_element_type=f32)

    # norm_2 + SwiGLU MLP (fc_1|fc_2 fused, lane-dense) + second residual
    n2 = x * jax.lax.rsqrt(jnp.mean(x * x, axis=-1, keepdims=True) + EPS)
    n2 = n2 * wn2_ref[...]
    g = jnp.dot(n2.astype(bf16), wfc12_ref[...], preferred_element_type=f32)
    g1 = g[:, :inter]
    g2 = g[:, inter:]
    m = (g1 * jax.nn.sigmoid(g1)) * g2
    mlp = jnp.dot(m.astype(bf16), wmproj_ref[...], preferred_element_type=f32)
    o_ref[...] = (x + mlp).astype(o_ref.dtype)


# ----------------------------- one-time weight preprocessing -----------------
def preprocess_params(w_norm1, w_attn, w_proj, w_norm2, w_fc1, w_fc2, w_mproj):
    """Hoisted out of the forward path (pay once at parameter-load time):
    permute the interleaved fused-QKV rows to contiguous [Q|K|V], fold the
    softmax scale into Q, transpose every Linear weight, fuse fc_1|fc_2, and
    cast all MXU weights to bf16."""
    idx = jnp.arange(QKV_DIM).reshape(N_QUERY_GROUPS, Q_PER_KV + 2, HEAD_SIZE)
    perm = jnp.concatenate([
        idx[:, :Q_PER_KV, :].reshape(-1),
        idx[:, Q_PER_KV:Q_PER_KV + 1, :].reshape(-1),
        idx[:, Q_PER_KV + 1:, :].reshape(-1),
    ])
    w_fused = w_attn[perm, :]
    w_fused = w_fused.at[:Q_DIM, :].multiply(1.0 / math.sqrt(HEAD_SIZE))
    return dict(
        wn1=w_norm1.reshape(1, -1).astype(jnp.float32),
        wn2=w_norm2.reshape(1, -1).astype(jnp.float32),
        wqkv_t=w_fused.T.astype(jnp.bfloat16),                     # (C, QKV)
        wproj_t=w_proj.T.astype(jnp.bfloat16),                     # (C, C)
        wfc12_t=jnp.concatenate([w_fc1.T, w_fc2.T],
                                axis=1).astype(jnp.bfloat16),      # (C, 2I)
        wmproj_t=w_mproj.T.astype(jnp.bfloat16),                   # (I, C)
    )


# ----------------------------- forward wrapper --------------------------------
def _block_forward(x, cos, sin, params):
    """x: (B, T, C) f32; cos/sin: (T, head_size//2) f32; params preprocessed."""
    Bv, Tv, C = x.shape
    BT = Bv * Tv
    BG = Bv * N_QUERY_GROUPS
    PT = Q_PER_KV * Tv

    x2d = x.reshape(BT, C)

    # ---- K1: RMSNorm + fused QKV matmul on the (B*T, C) slab ----
    qkv = pl.pallas_call(
        norm_qkv_kernel,
        out_shape=jax.ShapeDtypeStruct((BT, QKV_DIM), jnp.bfloat16),
    )(x2d, params['wn1'], params['wqkv_t'])

    # ---- XLA-side layout plumbing (no in-kernel head slicing / stacking):
    #      split heads, fold q_per_kv into q rows, keep K/V un-replicated.
    q = (qkv[:, :Q_DIM]
         .reshape(Bv, Tv, N_QUERY_GROUPS, Q_PER_KV, HEAD_SIZE)
         .transpose(0, 2, 3, 1, 4)
         .reshape(BG, PT, HEAD_SIZE))
    k = (qkv[:, Q_DIM:Q_DIM + KV_DIM]
         .reshape(Bv, Tv, N_QUERY_GROUPS, HEAD_SIZE)
         .transpose(0, 2, 1, 3)
         .reshape(BG, Tv, HEAD_SIZE))
    v = (qkv[:, Q_DIM + KV_DIM:]
         .reshape(Bv, Tv, N_QUERY_GROUPS, HEAD_SIZE)
         .transpose(0, 2, 1, 3)
         .reshape(BG, Tv, HEAD_SIZE))

    # full-head-width RoPE tables, passed once (not tiled by B).
    cos_full = jnp.concatenate([cos, cos], axis=-1)           # (T, hs)
    sin_sgn = jnp.concatenate([-sin, sin], axis=-1)           # (T, hs) signed
    cos_q = jnp.tile(cos_full, (Q_PER_KV, 1))                 # (q_per_kv*T, hs)
    sin_q = jnp.tile(sin_sgn, (Q_PER_KV, 1))

    # ---- K2: grouped-query causal attention, grid over (B * n_query_groups) --
    y = pl.pallas_call(
        gqa_attn_kernel,
        out_shape=jax.ShapeDtypeStruct((BG, PT, HEAD_SIZE), jnp.bfloat16),
        grid=(BG,),
        in_specs=[
            pl.BlockSpec((PT, HEAD_SIZE), lambda g: (0, 0)),           # cos_q
            pl.BlockSpec((PT, HEAD_SIZE), lambda g: (0, 0)),           # sin_q
            pl.BlockSpec((Tv, HEAD_SIZE), lambda g: (0, 0)),           # cos_k
            pl.BlockSpec((Tv, HEAD_SIZE), lambda g: (0, 0)),           # sin_k
            pl.BlockSpec((None, PT, HEAD_SIZE), lambda g: (g, 0, 0)),  # q
            pl.BlockSpec((None, Tv, HEAD_SIZE), lambda g: (g, 0, 0)),  # k
            pl.BlockSpec((None, Tv, HEAD_SIZE), lambda g: (g, 0, 0)),  # v
        ],
        out_specs=pl.BlockSpec((None, PT, HEAD_SIZE), lambda g: (g, 0, 0)),
        compiler_params=pltpu.CompilerParams(
            dimension_semantics=("parallel",)),  # v7x: 2 TCs split this axis
    )(cos_q, sin_q, cos_full, sin_sgn, q, k, v)

    # merge heads back to (B*T, C) in XLA — layout plumbing, not in-kernel concat.
    y2d = (y.reshape(Bv, N_QUERY_GROUPS, Q_PER_KV, Tv, HEAD_SIZE)
           .transpose(0, 3, 1, 2, 4)
           .reshape(BT, C))

    # ---- K3: attn.proj + residual + norm_2 + SwiGLU MLP + residual ----
    out2d = pl.pallas_call(
        proj_mlp_kernel,
        out_shape=jax.ShapeDtypeStruct((BT, C), jnp.float32),
    )(x2d, y2d, params['wproj_t'], params['wn2'],
      params['wfc12_t'], params['wmproj_t'])

    return out2d.reshape(Bv, Tv, C)


block_forward = jax.jit(_block_forward)


# ----------------------------- pure-JAX reference ----------------------------
def ref_block(x, cos, sin, w_norm1, w_attn, w_proj, w_norm2, w_fc1, w_fc2,
              w_mproj):
    """Mirrors the PyTorch forward exactly (f32, interleaved qkv view/split)."""
    def rms(z, w):
        return z * jax.lax.rsqrt(jnp.mean(z * z, axis=-1, keepdims=True) + EPS) * w

    n1 = rms(x, w_norm1)
    qkv = n1 @ w_attn.T
    qkv = qkv.reshape(B, T, N_QUERY_GROUPS, Q_PER_KV + 2, HEAD_SIZE)
    q = qkv[:, :, :, :Q_PER_KV, :].reshape(B, T, N_HEAD, HEAD_SIZE)
    k = qkv[:, :, :, Q_PER_KV:Q_PER_KV + 1, :].reshape(B, T, N_QUERY_GROUPS, HEAD_SIZE)
    v = qkv[:, :, :, Q_PER_KV + 1:, :].reshape(B, T, N_QUERY_GROUPS, HEAD_SIZE)

    def rope(t):
        h = HEAD_SIZE // 2
        t1, t2 = t[..., :h], t[..., h:]
        c = cos[None, :, None, :]
        s = sin[None, :, None, :]
        return jnp.concatenate([t1 * c - t2 * s, t1 * s + t2 * c], axis=-1)

    q = rope(q).transpose(0, 2, 1, 3)                                   # (B,H,T,hs)
    k = jnp.repeat(rope(k).transpose(0, 2, 1, 3), Q_PER_KV, axis=1)
    v = jnp.repeat(v.transpose(0, 2, 1, 3), Q_PER_KV, axis=1)

    scale = 1.0 / math.sqrt(HEAD_SIZE)
    s = jnp.einsum('bhtd,bhsd->bhts', q, k) * scale
    causal = jnp.tril(jnp.ones((T, T), dtype=bool))
    s = jnp.where(causal[None, None], s, -jnp.inf)
    p = jax.nn.softmax(s, axis=-1)
    y = jnp.einsum('bhts,bhsd->bhtd', p, v)
    y = y.transpose(0, 2, 1, 3).reshape(B, T, N_EMBD)

    x = x + y @ w_proj.T
    n2 = rms(x, w_norm2)
    m = jax.nn.silu(n2 @ w_fc1.T) * (n2 @ w_fc2.T)
    return x + m @ w_mproj.T


# ----------------------------- main ------------------------------------------
if __name__ == "__main__":
    key = jax.random.PRNGKey(0)
    ks = jax.random.split(key, 8)

    x = jax.random.normal(ks[0], (B, T, N_EMBD), dtype=jnp.float32)

    # Parameters (deterministic synthetic init, PyTorch Linear layout (out, in))
    w_norm1 = jnp.ones((N_EMBD,), jnp.float32)
    w_norm2 = jnp.ones((N_EMBD,), jnp.float32)
    w_attn = 0.05 * jax.random.normal(ks[1], (QKV_DIM, N_EMBD), jnp.float32)
    w_proj = 0.05 * jax.random.normal(ks[2], (N_EMBD, N_EMBD), jnp.float32)
    w_fc1 = 0.05 * jax.random.normal(ks[3], (INTERMEDIATE, N_EMBD), jnp.float32)
    w_fc2 = 0.05 * jax.random.normal(ks[4], (INTERMEDIATE, N_EMBD), jnp.float32)
    w_mproj = 0.05 * jax.random.normal(ks[5], (N_EMBD, INTERMEDIATE), jnp.float32)

    # RoPE cache (lit_gpt build_rope_cache): cos/sin of shape (T, head_size//2)
    theta = 1.0 / (ROPE_BASE ** (jnp.arange(0, HEAD_SIZE, 2, dtype=jnp.float32)
                                 / HEAD_SIZE))
    pos = jnp.arange(T, dtype=jnp.float32)
    idx_theta = jnp.outer(pos, theta)
    cos, sin = jnp.cos(idx_theta), jnp.sin(idx_theta)

    # one-time weight preprocessing, hoisted out of the forward path
    params = jax.block_until_ready(
        preprocess_params(w_norm1, w_attn, w_proj, w_norm2, w_fc1, w_fc2,
                          w_mproj))

    out = block_forward(x, cos, sin, params)
    out = jax.block_until_ready(out)

    ref = ref_block(x, cos, sin, w_norm1, w_attn, w_proj, w_norm2, w_fc1, w_fc2,
                    w_mproj)
    assert out.shape == (B, T, N_EMBD)
    # bf16 MXU operands / bf16 inter-kernel activations + approx reciprocal ->
    # loosened tolerance vs the f32 reference
    assert jnp.allclose(out, ref, atol=2e-2, rtol=2e-2), (
        float(jnp.max(jnp.abs(out - ref))))

    print("KERNEL_OK")
</pallas_src>

<mosaic_0001>
module attributes {stable_mosaic.version = 11 : i64} {
  func.func @norm_qkv_kernel(%arg0: memref<16x32xf32, #tpu.memory_space<vmem>>, %arg1: memref<1x32xf32, #tpu.memory_space<vmem>>, %arg2: memref<32x64xbf16, #tpu.memory_space<vmem>>, %arg3: memref<16x64xbf16, #tpu.memory_space<vmem>>) attributes {dimension_semantics = [], scalar_prefetch = 0 : i64, scratch_operands = 0 : i64, tpu.core_type = #tpu.core_type<tc>} {
    %c0 = arith.constant 0 : index
    %c0_0 = arith.constant 0 : index
    %0 = vector.load %arg0[%c0, %c0_0] : memref<16x32xf32, #tpu.memory_space<vmem>>, vector<16x32xf32>
    %1 = arith.mulf %0, %0 : vector<16x32xf32>
    %cst = arith.constant dense<0.000000e+00> : vector<16xf32>
    %2 = vector.multi_reduction <add>, %1, %cst [1] : vector<16x32xf32> to vector<16xf32>
    %3 = vector.shape_cast %2 : vector<16xf32> to vector<16x1xf32>
    %cst_1 = arith.constant 3.200000e+01 : f32
    %4 = vector.broadcast %cst_1 : f32 to vector<16x1xf32>
    %5 = arith.divf %3, %4 : vector<16x1xf32>
    %cst_2 = arith.constant 9.99999974E-6 : f32
    %6 = vector.broadcast %cst_2 : f32 to vector<16x1xf32>
    %7 = arith.addf %5, %6 : vector<16x1xf32>
    %8 = math.rsqrt %7 : vector<16x1xf32>
    %9 = vector.broadcast %8 : vector<16x1xf32> to vector<16x32xf32>
    %10 = arith.mulf %0, %9 : vector<16x32xf32>
    %c0_3 = arith.constant 0 : index
    %c0_4 = arith.constant 0 : index
    %11 = vector.load %arg1[%c0_3, %c0_4] : memref<1x32xf32, #tpu.memory_space<vmem>>, vector<1x32xf32>
    %12 = vector.broadcast %11 : vector<1x32xf32> to vector<16x32xf32>
    %13 = arith.mulf %10, %12 : vector<16x32xf32>
    %14 = arith.truncf %13 : vector<16x32xf32> to vector<16x32xbf16>
    %c0_5 = arith.constant 0 : index
    %c0_6 = arith.constant 0 : index
    %15 = vector.load %arg2[%c0_5, %c0_6] : memref<32x64xbf16, #tpu.memory_space<vmem>>, vector<32x64xbf16>
    %cst_7 = arith.constant dense<0.000000e+00> : vector<16x64xf32>
    %16 = tpu.matmul %14, %15, %cst_7 {dimension_numbers = #tpu.dot_dimension_numbers<[1], [0], [0], [1], [0, 0, 1, 1], [], []>} : vector<16x32xbf16>, vector<32x64xbf16>, vector<16x64xf32> -> vector<16x64xf32>
    %17 = arith.truncf %16 : vector<16x64xf32> to vector<16x64xbf16>
    %c0_8 = arith.constant 0 : index
    %c0_9 = arith.constant 0 : index
    %18 = vector.load %arg3[%c0_8, %c0_9] : memref<16x64xbf16, #tpu.memory_space<vmem>>, vector<16x64xbf16>
    tpu.vector_store %arg3[%c0_8, %c0_9], %17 {strides = array<i32>} : memref<16x64xbf16, #tpu.memory_space<vmem>>, vector<16x64xbf16>,
    return
  }
}

module attributes {stable_mosaic.version = 11 : i64} {
  func.func @gqa_attn_kernel(%arg0: i32, %arg1: memref<16x8xf32, #tpu.memory_space<vmem>>, %arg2: memref<16x8xf32, #tpu.memory_space<vmem>>, %arg3: memref<8x8xf32, #tpu.memory_space<vmem>>, %arg4: memref<8x8xf32, #tpu.memory_space<vmem>>, %arg5: memref<1x16x8xbf16, #tpu.memory_space<vmem>>, %arg6: memref<1x8x8xbf16, #tpu.memory_space<vmem>>, %arg7: memref<1x8x8xbf16, #tpu.memory_space<vmem>>, %arg8: memref<1x16x8xbf16, #tpu.memory_space<vmem>>) attributes {dimension_semantics = [#tpu.dimension_semantics<parallel>], iteration_bounds = array<i64: 4>, scalar_prefetch = 0 : i64, scratch_operands = 0 : i64, tpu.core_type = #tpu.core_type<tc>, window_params = [{pipeline_mode = #tpu.pipeline_mode<synchronous>, transform_indices = @transform_0, window_bounds = array<i64: 16, 8>}, {pipeline_mode = #tpu.pipeline_mode<synchronous>, transform_indices = @transform_1, window_bounds = array<i64: 16, 8>}, {pipeline_mode = #tpu.pipeline_mode<synchronous>, transform_indices = @transform_2, window_bounds = array<i64: 8, 8>}, {pipeline_mode = #tpu.pipeline_mode<synchronous>, transform_indices = @transform_3, window_bounds = array<i64: 8, 8>}, {transform_indices = @transform_4, window_bounds = array<i64: 1, 16, 8>}, {transform_indices = @transform_5, window_bounds = array<i64: 1, 8, 8>}, {transform_indices = @transform_6, window_bounds = array<i64: 1, 8, 8>}, {transform_indices = @transform_7, window_bounds = array<i64: 1, 16, 8>}]} {
    %c0 = arith.constant 0 : index
    %c0_0 = arith.constant 0 : index
    %c0_1 = arith.constant 0 : index
    %0 = vector.load %arg5[%c0, %c0_0, %c0_1] : memref<1x16x8xbf16, #tpu.memory_space<vmem>>, vector<1x16x8xbf16>
    %1 = vector.shape_cast %0 : vector<1x16x8xbf16> to vector<16x8xbf16>
    %2 = arith.extf %1 : vector<16x8xbf16> to vector<16x8xf32>
    %c0_2 = arith.constant 0 : index
    %c0_3 = arith.constant 0 : index
    %3 = vector.load %arg1[%c0_2, %c0_3] : memref<16x8xf32, #tpu.memory_space<vmem>>, vector<16x8xf32>
    %c0_4 = arith.constant 0 : index
    %c0_5 = arith.constant 0 : index
    %4 = vector.load %arg2[%c0_4, %c0_5] : memref<16x8xf32, #tpu.memory_space<vmem>>, vector<16x8xf32>
    %5 = vector.extract_strided_slice %2 {offsets = [0, 4], sizes = [16, 4], strides = [1, 1]} : vector<16x8xf32> to vector<16x4xf32>
    %6 = vector.extract_strided_slice %2 {offsets = [0, 0], sizes = [16, 4], strides = [1, 1]} : vector<16x8xf32> to vector<16x4xf32>
    %7 = tpu.concatenate %5, %6 in 1 : vector<16x4xf32>, vector<16x4xf32> -> vector<16x8xf32>
    %8 = arith.mulf %2, %3 : vector<16x8xf32>
    %9 = arith.mulf %7, %4 : vector<16x8xf32>
    %10 = arith.addf %8, %9 : vector<16x8xf32>
    %c0_6 = arith.constant 0 : index
    %c0_7 = arith.constant 0 : index
    %c0_8 = arith.constant 0 : index
    %11 = vector.load %arg6[%c0_6, %c0_7, %c0_8] : memref<1x8x8xbf16, #tpu.memory_space<vmem>>, vector<1x8x8xbf16>
    %12 = vector.shape_cast %11 : vector<1x8x8xbf16> to vector<8x8xbf16>
    %13 = arith.extf %12 : vector<8x8xbf16> to vector<8x8xf32>
    %c0_9 = arith.constant 0 : index
    %c0_10 = arith.constant 0 : index
    %14 = vector.load %arg3[%c0_9, %c0_10] : memref<8x8xf32, #tpu.memory_space<vmem>>, vector<8x8xf32>
    %c0_11 = arith.constant 0 : index
    %c0_12 = arith.constant 0 : index
    %15 = vector.load %arg4[%c0_11, %c0_12] : memref<8x8xf32, #tpu.memory_space<vmem>>, vector<8x8xf32>
    %16 = vector.extract_strided_slice %13 {offsets = [0, 4], sizes = [8, 4], strides = [1, 1]} : vector<8x8xf32> to vector<8x4xf32>
    %17 = vector.extract_strided_slice %13 {offsets = [0, 0], sizes = [8, 4], strides = [1, 1]} : vector<8x8xf32> to vector<8x4xf32>
    %18 = tpu.concatenate %16, %17 in 1 : vector<8x4xf32>, vector<8x4xf32> -> vector<8x8xf32>
    %19 = arith.mulf %13, %14 : vector<8x8xf32>
    %20 = arith.mulf %18, %15 : vector<8x8xf32>
    %21 = arith.addf %19, %20 : vector<8x8xf32>
    %22 = arith.truncf %10 : vector<16x8xf32> to vector<16x8xbf16>
    %23 = arith.truncf %21 : vector<8x8xf32> to vector<8x8xbf16>
    "tpu.trace_start"() <{level = 10 : i32, message = "qd,kd->qk"}> : () -> ()
    %cst = arith.constant dense<0.000000e+00> : vector<16x8xf32>
    %24 = tpu.matmul %22, %23, %cst {dimension_numbers = #tpu.dot_dimension_numbers<[1], [1], [0], [0], [0, 0, 1, 0], [], []>} : vector<16x8xbf16>, vector<8x8xbf16>, vector<16x8xf32> -> vector<16x8xf32>
    "tpu.trace_stop"() : () -> ()
    %25 = tpu.iota {dimensions = array<i32: 0>} : vector<8x8xi32>
    %26 = tpu.iota {dimensions = array<i32: 1>} : vector<8x8xi32>
    %27 = arith.cmpi sge, %25, %26 : vector<8x8xi32>
    %28 = vector.shape_cast %24 : vector<16x8xf32> to vector<2x8x8xf32>
    %29 = vector.shape_cast %27 : vector<8x8xi1> to vector<1x8x8xi1>
    %cst_13 = arith.constant -1.000000e+30 : f32
    %30 = vector.shape_cast %29 : vector<1x8x8xi1> to vector<1x8x8xi1>
    %31 = vector.broadcast %30 : vector<1x8x8xi1> to vector<2x8x8xi1>
    %32 = vector.broadcast %cst_13 : f32 to vector<2x8x8xf32>
    %33 = arith.select %31, %28, %32 : vector<2x8x8xi1>, vector<2x8x8xf32>
    %cst_14 = arith.constant dense<0xFF800000> : vector<2x8xf32>
    %34 = vector.multi_reduction <maximumf>, %33, %cst_14 [2] : vector<2x8x8xf32> to vector<2x8xf32>
    %35 = vector.shape_cast %34 : vector<2x8xf32> to vector<2x8x1xf32>
    %36 = vector.broadcast %35 : vector<2x8x1xf32> to vector<2x8x8xf32>
    %37 = arith.subf %33, %36 : vector<2x8x8xf32>
    %38 = math.exp %37 : vector<2x8x8xf32>
    %cst_15 = arith.constant dense<0.000000e+00> : vector<2x8xf32>
    %39 = vector.multi_reduction <add>, %38, %cst_15 [2] : vector<2x8x8xf32> to vector<2x8xf32>
    %40 = vector.shape_cast %39 : vector<2x8xf32> to vector<2x8x1xf32>
    %41 = tpu.reciprocal %40 {approx = true} : vector<2x8x1xf32> -> vector<2x8x1xf32>
    %42 = vector.shape_cast %38 : vector<2x8x8xf32> to vector<16x8xf32>
    %43 = arith.truncf %42 : vector<16x8xf32> to vector<16x8xbf16>
    %c0_16 = arith.constant 0 : index
    %c0_17 = arith.constant 0 : index
    %c0_18 = arith.constant 0 : index
    %44 = vector.load %arg7[%c0_16, %c0_17, %c0_18] : memref<1x8x8xbf16, #tpu.memory_space<vmem>>, vector<1x8x8xbf16>
    %45 = vector.shape_cast %44 : vector<1x8x8xbf16> to vector<8x8xbf16>
    %cst_19 = arith.constant dense<0.000000e+00> : vector<16x8xf32>
    %46 = tpu.matmul %43, %45, %cst_19 {dimension_numbers = #tpu.dot_dimension_numbers<[1], [0], [0], [1], [0, 0, 1, 1], [], []>} : vector<16x8xbf16>, vector<8x8xbf16>, vector<16x8xf32> -> vector<16x8xf32>
    %47 = vector.shape_cast %41 : vector<2x8x1xf32> to vector<16x1xf32>
    %48 = vector.broadcast %47 : vector<16x1xf32> to vector<16x8xf32>
    %49 = arith.mulf %46, %48 : vector<16x8xf32>
    %50 = arith.truncf %49 : vector<16x8xf32> to vector<16x8xbf16>
    %c0_20 = arith.constant 0 : index
    %c0_21 = arith.constant 0 : index
    %c0_22 = arith.constant 0 : index
    %51 = vector.load %arg8[%c0_20, %c0_21, %c0_22] : memref<1x16x8xbf16, #tpu.memory_space<vmem>>, vector<1x16x8xbf16>
    %52 = vector.shape_cast %51 : vector<1x16x8xbf16> to vector<16x8xbf16>
    %53 = vector.shape_cast %50 : vector<16x8xbf16> to vector<1x16x8xbf16>
    tpu.vector_store %arg8[%c0_20, %c0_21, %c0_22], %53 {strides = array<i32>} : memref<1x16x8xbf16, #tpu.memory_space<vmem>>, vector<1x16x8xbf16>,
    return
  }
  func.func @transform_0(%arg0: i32) -> (i32, i32) {
    %c0_i32 = arith.constant 0 : i32
    %c0_i32_0 = arith.constant 0 : i32
    %c0_i32_1 = arith.constant 0 : i32
    return %c0_i32, %c0_i32_0 : i32, i32
  }
  func.func @transform_1(%arg0: i32) -> (i32, i32) {
    %c0_i32 = arith.constant 0 : i32
    %c0_i32_0 = arith.constant 0 : i32
    %c0_i32_1 = arith.constant 0 : i32
    return %c0_i32, %c0_i32_0 : i32, i32
  }
  func.func @transform_2(%arg0: i32) -> (i32, i32) {
    %c0_i32 = arith.constant 0 : i32
    %c0_i32_0 = arith.constant 0 : i32
    %c0_i32_1 = arith.constant 0 : i32
    return %c0_i32, %c0_i32_0 : i32, i32
  }
  func.func @transform_3(%arg0: i32) -> (i32, i32) {
    %c0_i32 = arith.constant 0 : i32
    %c0_i32_0 = arith.constant 0 : i32
    %c0_i32_1 = arith.constant 0 : i32
    return %c0_i32, %c0_i32_0 : i32, i32
  }
  func.func @transform_4(%arg0: i32) -> (i32, i32, i32) {
    %c0_i32 = arith.constant 0 : i32
    %c0_i32_0 = arith.constant 0 : i32
    %c0_i32_1 = arith.constant 0 : i32
    return %arg0, %c0_i32, %c0_i32_0 : i32, i32, i32
  }
  func.func @transform_5(%arg0: i32) -> (i32, i32, i32) {
    %c0_i32 = arith.constant 0 : i32
    %c0_i32_0 = arith.constant 0 : i32
    %c0_i32_1 = arith.constant 0 : i32
    return %arg0, %c0_i32, %c0_i32_0 : i32, i32, i32
  }
  func.func @transform_6(%arg0: i32) -> (i32, i32, i32) {
    %c0_i32 = arith.constant 0 : i32
    %c0_i32_0 = arith.constant 0 : i32
    %c0_i32_1 = arith.constant 0 : i32
    return %arg0, %c0_i32, %c0_i32_0 : i32, i32, i32
  }
  func.func @transform_7(%arg0: i32) -> (i32, i32, i32) {
    %c0_i32 = arith.constant 0 : i32
    %c0_i32_0 = arith.constant 0 : i32
    %c0_i32_1 = arith.constant 0 : i32
    return %arg0, %c0_i32, %c0_i32_0 : i32, i32, i32
  }
}

module attributes {stable_mosaic.version = 11 : i64} {
  func.func @proj_mlp_kernel(%arg0: memref<16x32xf32, #tpu.memory_space<vmem>>, %arg1: memref<16x32xbf16, #tpu.memory_space<vmem>>, %arg2: memref<32x32xbf16, #tpu.memory_space<vmem>>, %arg3: memref<1x32xf32, #tpu.memory_space<vmem>>, %arg4: memref<32x128xbf16, #tpu.memory_space<vmem>>, %arg5: memref<64x32xbf16, #tpu.memory_space<vmem>>, %arg6: memref<16x32xf32, #tpu.memory_space<vmem>>) attributes {dimension_semantics = [], scalar_prefetch = 0 : i64, scratch_operands = 0 : i64, tpu.core_type = #tpu.core_type<tc>} {
    %c0 = arith.constant 0 : index
    %c0_0 = arith.constant 0 : index
    %0 = vector.load %arg0[%c0, %c0_0] : memref<16x32xf32, #tpu.memory_space<vmem>>, vector<16x32xf32>
    %c0_1 = arith.constant 0 : index
    %c0_2 = arith.constant 0 : index
    %1 = vector.load %arg1[%c0_1, %c0_2] : memref<16x32xbf16, #tpu.memory_space<vmem>>, vector<16x32xbf16>
    %c0_3 = arith.constant 0 : index
    %c0_4 = arith.constant 0 : index
    %2 = vector.load %arg2[%c0_3, %c0_4] : memref<32x32xbf16, #tpu.memory_space<vmem>>, vector<32x32xbf16>
    %cst = arith.constant dense<0.000000e+00> : vector<16x32xf32>
    %3 = tpu.matmul %1, %2, %cst {dimension_numbers = #tpu.dot_dimension_numbers<[1], [0], [0], [1], [0, 0, 1, 1], [], []>} : vector<16x32xbf16>, vector<32x32xbf16>, vector<16x32xf32> -> vector<16x32xf32>
    %4 = arith.addf %0, %3 : vector<16x32xf32>
    %5 = arith.mulf %4, %4 : vector<16x32xf32>
    %cst_5 = arith.constant dense<0.000000e+00> : vector<16xf32>
    %6 = vector.multi_reduction <add>, %5, %cst_5 [1] : vector<16x32xf32> to vector<16xf32>
    %7 = vector.shape_cast %6 : vector<16xf32> to vector<16x1xf32>
    %cst_6 = arith.constant 3.200000e+01 : f32
    %8 = vector.broadcast %cst_6 : f32 to vector<16x1xf32>
    %9 = arith.divf %7, %8 : vector<16x1xf32>
    %cst_7 = arith.constant 9.99999974E-6 : f32
    %10 = vector.broadcast %cst_7 : f32 to vector<16x1xf32>
    %11 = arith.addf %9, %10 : vector<16x1xf32>
    %12 = math.rsqrt %11 : vector<16x1xf32>
    %13 = vector.broadcast %12 : vector<16x1xf32> to vector<16x32xf32>
    %14 = arith.mulf %4, %13 : vector<16x32xf32>
    %c0_8 = arith.constant 0 : index
    %c0_9 = arith.constant 0 : index
    %15 = vector.load %arg3[%c0_8, %c0_9] : memref<1x32xf32, #tpu.memory_space<vmem>>, vector<1x32xf32>
    %16 = vector.broadcast %15 : vector<1x32xf32> to vector<16x32xf32>
    %17 = arith.mulf %14, %16 : vector<16x32xf32>
    %18 = arith.truncf %17 : vector<16x32xf32> to vector<16x32xbf16>
    %c0_10 = arith.constant 0 : index
    %c0_11 = arith.constant 0 : index
    %19 = vector.load %arg4[%c0_10, %c0_11] : memref<32x128xbf16, #tpu.memory_space<vmem>>, vector<32x128xbf16>
    %cst_12 = arith.constant dense<0.000000e+00> : vector<16x128xf32>
    %20 = tpu.matmul %18, %19, %cst_12 {dimension_numbers = #tpu.dot_dimension_numbers<[1], [0], [0], [1], [0, 0, 1, 1], [], []>} : vector<16x32xbf16>, vector<32x128xbf16>, vector<16x128xf32> -> vector<16x128xf32>
    %21 = vector.extract_strided_slice %20 {offsets = [0, 0], sizes = [16, 64], strides = [1, 1]} : vector<16x128xf32> to vector<16x64xf32>
    %22 = vector.extract_strided_slice %20 {offsets = [0, 64], sizes = [16, 64], strides = [1, 1]} : vector<16x128xf32> to vector<16x64xf32>
    %23 = arith.negf %21 : vector<16x64xf32>
    %24 = math.exp %23 : vector<16x64xf32>
    %cst_13 = arith.constant 1.000000e+00 : f32
    %25 = vector.broadcast %cst_13 : f32 to vector<16x64xf32>
    %26 = arith.addf %25, %24 : vector<16x64xf32>
    %27 = arith.divf %25, %26 : vector<16x64xf32>
    %28 = arith.mulf %21, %27 : vector<16x64xf32>
    %29 = arith.mulf %28, %22 : vector<16x64xf32>
    %30 = arith.truncf %29 : vector<16x64xf32> to vector<16x64xbf16>
    %c0_14 = arith.constant 0 : index
    %c0_15 = arith.constant 0 : index
    %31 = vector.load %arg5[%c0_14, %c0_15] : memref<64x32xbf16, #tpu.memory_space<vmem>>, vector<64x32xbf16>
    %cst_16 = arith.constant dense<0.000000e+00> : vector<16x32xf32>
    %32 = tpu.matmul %30, %31, %cst_16 {dimension_numbers = #tpu.dot_dimension_numbers<[1], [0], [0], [1], [0, 0, 1, 1], [], []>} : vector<16x64xbf16>, vector<64x32xbf16>, vector<16x32xf32> -> vector<16x32xf32>
    %33 = arith.addf %4, %32 : vector<16x32xf32>
    %c0_17 = arith.constant 0 : index
    %c0_18 = arith.constant 0 : index
    %34 = vector.load %arg6[%c0_17, %c0_18] : memref<16x32xf32, #tpu.memory_space<vmem>>, vector<16x32xf32>
    tpu.vector_store %arg6[%c0_17, %c0_18], %33 {strides = array<i32>} : memref<16x32xf32, #tpu.memory_space<vmem>>, vector<16x32xf32>,
    return
  }
}

</mosaic_0001>

<llo_original>
// kernel: neg.1
$region0: #{neg.1}
  #allocation0 [shape = 's32[1]{0}', space=sflag, size = 0x4, scoped, tag = 'scoped memory for neg.1']
  %s0 = inlined_call_operand.vmem [shape: f32[8,4], index: 0, kind: input, shape index: {}]
  %s1 = inlined_call_operand.vmem [shape: f32[8,4], index: 1, kind: output, shape index: {}]
  %v2 = vld [vmem:[%s0] sm:$0xff]
  %3 = xla_tuple %v2
  %4 = xla_tuple %3
  %v5 = vxor.u32 %v2, 2147483648
  %6 = xla_tuple %v5
  %7 = vst [vmem:[%s1] sm:$0xff] %v5

// kernel: _block_forward.3
$region0: #{_block_forward.3}
  #allocation0 [shape = 'u32[]', space=smem, size = 0x4, offset = 0x4, fixed_abs, tag = 'smem constant byte address 0x4 - core index']
  #allocation1 [shape = 'u32[144,128]{1,0:T(1,128)}', space=vmem, size = 0x12000, scoped, tag = 'internal scratch']
  %s0 = inlined_call_operand.hbm [shape: f32[16,32], index: 0, kind: input, shape index: {}]
  %s1 = inlined_call_operand.vmem [shape: f32[1,32], index: 1, kind: input, shape index: {}]
  %s2 = inlined_call_operand.vmem [shape: bf16[32,64], index: 2, kind: input, shape index: {}]
  %s3 = inlined_call_operand.vmem [shape: bf16[16,64], index: 3, kind: output, shape index: {}]
  %s4 = sld [smem:[#allocation0]]
  $region26: #{_block_forward.3} parent=0
    _
  %s6 = ssub.s32 1, %s4
  %s7 = scalar_select 0, %s6, %s4
  $region1: #{_block_forward.3} parent=0
    #allocation2 [shape = 'u8[8192]{0}', space=vmem, size = 0x2000, scoped, tag = 'input window, operand 0, single buffered']
    #allocation3 [shape = 's32[1]{0}', space=sflag, size = 0x4, scoped, tag = 'scoped memory for _block_forward.3']
    %8 = vsyncpa [#allocation3], 0
    // Predicated region
    $region2: #{_block_forward.3} parent=1 // pred_check
      _
    $region3: #{_block_forward.3} parent=1 // pred_check_branch
      %10 = sbr.rel (0) target = $region5
    $region4: #{_block_forward.3} parent=1 // pred_region
      %s12 = ssub.s32 256, 256
      %13 = vsyncadd [#allocation3], %s12
      %s14 = sshll.u32 [#allocation2], 4
      %s15 = int_to_ptr.vmem [resolvable:$true] %s14
      %20 = dma.hbm_to_vmem [thread:$0]  %s0, 256, %s15, [#allocation3], 128, 128, 8
    $region5: #{_block_forward.3} parent=1 // pred_fallthru
      _
    // Predicated region
    $region6: #{_block_forward.3} parent=1 // pred_check
      _
    $region7: #{_block_forward.3} parent=1 // pred_check_branch
      %22 = sbr.rel (0) target = $region9
    $region8: #{_block_forward.3} parent=1 // pred_region
      _
    $region9: #{_block_forward.3} parent=1 // pred_fallthru
      _
    // Predicated region
    $region10: #{_block_forward.3} parent=1 // pred_check
      _
    $region11: #{_block_forward.3} parent=1 // pred_check_branch
      %24 = sbr.rel (0) target = $region13
    $region12: #{_block_forward.3} parent=1 // pred_region
      _
    $region13: #{_block_forward.3} parent=1 // pred_fallthru
      _
    // Predicated region
    $region14: #{_block_forward.3} parent=1 // pred_check
      _
    $region15: #{_block_forward.3} parent=1 // pred_check_branch
      %26 = sbr.rel (0) target = $region17
    $region16: #{_block_forward.3} parent=1 // pred_region
      %27 = dma.done [#allocation3], 256
    $region17: #{_block_forward.3} parent=1 // pred_fallthru
      _
    %v29 = vld [vmem:[#allocation2] sm:$0xff]
    %v30 = vld [vmem:[#allocation2 + $0x8] sm:$0xff]
    %v31 = vmul.f32 %v29, %v29
    %v32 = vmul.f32 %v30, %v30
    %vm33 = vcmask 261120
    %v34 = vsel %vm33, %v31, 0.0
    %35 = vadd.xlane.f32.xlu0 %v34
    %v36 = vpop.xlane.xlu0 %35
    %v37 = vsel %vm33, %v32, 0.0
    %38 = vadd.xlane.f32.xlu0 %v37
    %v39 = vpop.xlane.xlu0 %38
    %v40 = vrcp.pop 32.0
    %v41 = vmul.f32 %v36, %v40
    %v42 = vmul.f32 %v39, %v40
    %v43 = vadd.f32 %v41, 1e-05
    %v44 = vadd.f32 %v42, 1e-05
    %v45 = vrsqrt.pop %v43
    %v46 = vrsqrt.pop %v44
    %v47 = vmul.f32 %v29, %v45
    %v48 = vmul.f32 %v30, %v46
    %v49 = vld [vmem:[%s1] sm:$0x1]
    %v51 = vlaneseq
    %v52 = vshrl.u32 %v51, 7
    %v53 = vsub.s32 0, %v52
    %v54 = vrot.slane %v49, %v53
    %v56 = vmul.f32 %v47, %v54
    %v57 = vmul.f32 %v48, %v54
    %v58 = vpack.c.bf16 %v57, %v56
    %v59 = vld [vmem:[%s2] sm:$0xf]
    %v60 = vld [vmem:[%s2 + $0x4] sm:$0xf]
    %v61 = vld [vmem:[%s2 + $0x8] sm:$0xf]
    %v62 = vld [vmem:[%s2 + $0xc] sm:$0xf]
    %v67 = vunpack.c.l.b16 %v59
    %v68 = vunpack.c.l.b16 %v60
    %v69 = vunpack.c.l.b16 %v61
    %v70 = vunpack.c.l.b16 %v62
    %v71 = vpack.c.b16 %v68, %v67
    %v72 = vpack.c.b16 %v70, %v69
    %v76 = vsel %vm33, %v58, 0
    %78 = vmatprep.subr.bf16.mxu0 0
    %79 = vmatpush1.bf16.msra.mxu0 %v71
    %80 = vmatprep.subr.bf16.mxu0 0
    %81 = vmatpush1.bf16.msra.mxu0 %v72
    %82 = vmatprep.subr.bf16.mxu0 0
    %83 = vmatpush1.bf16.msra.mxu0 0
    %84 = vmatprep.subr.bf16.mxu0 0
    %85 = vmatpush1.bf16.msra.mxu0 0
    %86 = vmatprep.subr.bf16.mxu0 0
    %87 = vmatpush1.bf16.msra.mxu0 0
    %88 = vmatprep.subr.bf16.mxu0 0
    %89 = vmatpush1.bf16.msra.mxu0 0
    %90 = vmatprep.subr.bf16.mxu0 0
    %91 = vmatpush1.bf16.msra.mxu0 0
    %92 = vmatprep.subr.bf16.mxu0 0
    %93 = vmatpush1.bf16.msra.mxu0 0
    %94 = vmatprep.subr.bf16.mxu0 0
    %95 = vmatpush1.bf16.msra.mxu0 0
    %96 = vmatprep.subr.bf16.mxu0 0
    %97 = vmatpush1.bf16.msra.mxu0 0
    %98 = vmatprep.subr.bf16.mxu0 0
    %99 = vmatpush1.bf16.msra.mxu0 0
    %100 = vmatprep.subr.bf16.mxu0 0
    %101 = vmatpush1.bf16.msra.mxu0 0
    %102 = vmatprep.subr.bf16.mxu0 0
    %103 = vmatpush1.bf16.msra.mxu0 0
    %104 = vmatprep.subr.bf16.mxu0 0
    %105 = vmatpush1.bf16.msra.mxu0 0
    %106 = vmatprep.subr.bf16.mxu0 0
    %107 = vmatpush1.bf16.msra.mxu0 0
    %108 = vmatprep.subr.bf16.mxu0 0
    %109 = vmatpush1.bf16.msra.mxu0 0
    %110 = vmatprep.mubr.bf16.mxu0 0
    %111 = vmatmul.mubr.bf16.gmra.mrb[0].mxu0 %v76
    %v112 = vpop.f32.mrb[0].mxu0
    %v113 = vadd.f32 0.0, %v112
    %v114 = vpop.f32.mrb[0].mxu0
    %v115 = vpop.f32.mrb[0].mxu0
    %v116 = vadd.f32 0.0, %v115
    %v117 = vpop.f32.mrb[0].mxu0
    %118 = vdwg.mxu0
    %v119 = vpack.c.bf16 %v116, %v113
    %v121 = vunpack.c.l.b16 %v119
    %v122 = vunpack.c.h.b16 %v119
    %v123 = vpack.c.b16 %v121, %v121
    %v124 = vpack.c.b16 %v122, %v122
    %vm127 = vcmask 519168
    %128 = vst.msk [vmem:[%s3] sm:$0xf] %vm127, %v123
    %129 = vst.msk [vmem:[%s3 + $0x4] sm:$0xf] %vm127, %v124
    // Predicated region
    $region18: #{_block_forward.3} parent=1 // pred_check
      _
    $region19: #{_block_forward.3} parent=1 // pred_check_branch
      %131 = sbr.rel (0) target = $region21
    $region20: #{_block_forward.3} parent=1 // pred_region
      _
    $region21: #{_block_forward.3} parent=1 // pred_fallthru
      _
    // Predicated region
    $region22: #{_block_forward.3} parent=1 // pred_check
      _
    $region23: #{_block_forward.3} parent=1 // pred_check_branch
      %133 = sbr.rel (0) target = $region25
    $region24: #{_block_forward.3} parent=1 // pred_region
      _
    $region25: #{_block_forward.3} parent=1 // pred_fallthru
      _
    %134 = vsyncpa [#allocation3], 1

// kernel: _block_forward.4
$region0: #{_block_forward.4}
  #allocation0 [shape = 'u32[]', space=smem, size = 0x4, offset = 0x4, fixed_abs, tag = 'smem constant byte address 0x4 - core index']
  #allocation1 [shape = 'u32[144,128]{1,0:T(1,128)}', space=vmem, size = 0x12000, scoped, tag = 'internal scratch']
  %s0 = inlined_call_operand.vmem [shape: f32[16,8], index: 0, kind: input, shape index: {}]
  %s1 = inlined_call_operand.vmem [shape: f32[16,8], index: 1, kind: input, shape index: {}]
  %s2 = inlined_call_operand.vmem [shape: f32[8,8], index: 2, kind: input, shape index: {}]
  %s3 = inlined_call_operand.vmem [shape: f32[8,8], index: 3, kind: input, shape index: {}]
  %s4 = inlined_call_operand.vmem [shape: bf16[4,16,8], index: 4, kind: input, shape index: {}]
  %s5 = inlined_call_operand.vmem [shape: bf16[4,8,8], index: 5, kind: input, shape index: {}]
  %s6 = inlined_call_operand.vmem [shape: bf16[4,8,8], index: 6, kind: input, shape index: {}]
  %s7 = inlined_call_operand.vmem [shape: bf16[4,16,8], index: 7, kind: output, shape index: {}]
  %s8 = sld [smem:[#allocation0]]
  $region61: #{_block_forward.4} parent=0
    _
  %s10 = ssub.s32 1, %s8
  %s11 = scalar_select 0, %s10, %s8
  loop: start=0, step=1, limit=6
  $region2: #{_block_forward.4} parent=0 // loop_pre_header
    _
  $region3: #{_block_forward.4} parent=0 // loop_header
    %s13 = sphi 0, %s17
    %p14 = scmp.ge.s32.totalorder %s13, 6
    %s21 = sphi 0, %s21
    %s23 = sphi 0, %s21
    %s24 = sphi 0, %s23
    %s38 = sphi 0, %s24
    %s42 = sphi 0, %s42
    %s44 = sphi 0, %s42
    %s45 = sphi 0, %s44
    %s59 = sphi 0, %s45
    %s63 = sphi 0, %s63
    %s65 = sphi 0, %s63
    %s66 = sphi 0, %s65
    %s80 = sphi 0, %s66
    %s84 = sphi 0, %s84
    %s86 = sphi 0, %s84
    %s87 = sphi 0, %s86
    %s101 = sphi 0, %s87
    %s107 = sphi 0, %s109
    %s110 = sphi 0, %s107
    %s111 = sphi 0, %s110
    %s127 = sphi 0, %s111
    %s133 = sphi 0, %s135
    %s136 = sphi 0, %s133
    %s137 = sphi 0, %s136
    %s153 = sphi 0, %s137
    %s159 = sphi 0, %s161
    %s162 = sphi 0, %s159
    %s163 = sphi 0, %s162
    %s179 = sphi 0, %s163
    %s185 = sphi 0, %s187
    %s188 = sphi 0, %s185
    %s189 = sphi 0, %s188
    %s205 = sphi 0, %s189
  $region4: #{_block_forward.4} parent=0 // loop_header_branch
    %16 = sbr.rel (%p14) target = $region8
  $region5: #{_block_forward.4} parent=0 // loop_body
    %s18 = ssub.s32 %s13, 1
    %s19 = ssub.s32 %s13, 2
    %s20 = sadd.s32 %s13, 1
    %s22 = sadd.s32 %s21, 1
    %p25 = scmp.eq.s32.totalorder %s13, 3
    %p26 = scmp.ne.s32.totalorder %s21, %s23
    %p27 = scmp.eq.s32.totalorder %s13, 0
    %p28 = por %p26, %p27
    %p29 = scmp.ne.s32.totalorder %s21, %s23
    %p30 = scmp.eq.s32.totalorder %s18, 3
    %p31 = por %p29, %p30
    %p32 = scmp.ne.s32.totalorder %s23, %s24
    %p33 = scmp.eq.s32.totalorder %s18, 0
    %p34 = por %p32, %p33
    %p35 = scmp.ne.s32.totalorder %s23, %s24
    %p36 = scmp.eq.s32.totalorder %s19, 3
    %p37 = por %p35, %p36
    %p39 = scmp.ne.s32.totalorder %s24, %s38
    %p40 = scmp.eq.s32.totalorder %s19, 0
    %p41 = por %p39, %p40
    %s43 = sadd.s32 %s42, 1
    %p46 = scmp.eq.s32.totalorder %s13, 3
    %p47 = scmp.ne.s32.totalorder %s42, %s44
    %p48 = scmp.eq.s32.totalorder %s13, 0
    %p49 = por %p47, %p48
    %p50 = scmp.ne.s32.totalorder %s42, %s44
    %p51 = scmp.eq.s32.totalorder %s18, 3
    %p52 = por %p50, %p51
    %p53 = scmp.ne.s32.totalorder %s44, %s45
    %p54 = scmp.eq.s32.totalorder %s18, 0
    %p55 = por %p53, %p54
    %p56 = scmp.ne.s32.totalorder %s44, %s45
    %p57 = scmp.eq.s32.totalorder %s19, 3
    %p58 = por %p56, %p57
    %p60 = scmp.ne.s32.totalorder %s45, %s59
    %p61 = scmp.eq.s32.totalorder %s19, 0
    %p62 = por %p60, %p61
    %s64 = sadd.s32 %s63, 1
    %p67 = scmp.eq.s32.totalorder %s13, 3
    %p68 = scmp.ne.s32.totalorder %s63, %s65
    %p69 = scmp.eq.s32.totalorder %s13, 0
    %p70 = por %p68, %p69
    %p71 = scmp.ne.s32.totalorder %s63, %s65
    %p72 = scmp.eq.s32.totalorder %s18, 3
    %p73 = por %p71, %p72
    %p74 = scmp.ne.s32.totalorder %s65, %s66
    %p75 = scmp.eq.s32.totalorder %s18, 0
    %p76 = por %p74, %p75
    %p77 = scmp.ne.s32.totalorder %s65, %s66
    %p78 = scmp.eq.s32.totalorder %s19, 3
    %p79 = por %p77, %p78
    %p81 = scmp.ne.s32.totalorder %s66, %s80
    %p82 = scmp.eq.s32.totalorder %s19, 0
    %p83 = por %p81, %p82
    %s85 = sadd.s32 %s84, 1
    %p88 = scmp.eq.s32.totalorder %s13, 3
    %p89 = scmp.ne.s32.totalorder %s84, %s86
    %p90 = scmp.eq.s32.totalorder %s13, 0
    %p91 = por %p89, %p90
    %p92 = scmp.ne.s32.totalorder %s84, %s86
    %p93 = scmp.eq.s32.totalorder %s18, 3
    %p94 = por %p92, %p93
    %p95 = scmp.ne.s32.totalorder %s86, %s87
    %p96 = scmp.eq.s32.totalorder %s18, 0
    %p97 = por %p95, %p96
    %p98 = scmp.ne.s32.totalorder %s86, %s87
    %p99 = scmp.eq.s32.totalorder %s19, 3
    %p100 = por %p98, %p99
    %p102 = scmp.ne.s32.totalorder %s87, %s101
    %p103 = scmp.eq.s32.totalorder %s19, 0
    %p104 = por %p102, %p103
    %s105 = ssub.s32 %s13, %s20
    %p106 = scmp.eq.s32.totalorder %s105, 0
    %s108 = sadd.s32 %s107, 1
    %s109 = scalar_select %p106, %s107, %s108
    %p112 = pneg %p106
    %p113 = scmp.eq.s32.totalorder %s13, 3
    %p114 = por %p112, %p113
    %p115 = scmp.ne.s32.totalorder %s107, %s110
    %p116 = scmp.eq.s32.totalorder %s13, 0
    %p117 = por %p115, %p116
    %p118 = scmp.ne.s32.totalorder %s107, %s110
    %p119 = scmp.eq.s32.totalorder %s18, 3
    %p120 = por %p118, %p119
    %p121 = scmp.ne.s32.totalorder %s110, %s111
    %p122 = scmp.eq.s32.totalorder %s18, 0
    %p123 = por %p121, %p122
    %p124 = scmp.ne.s32.totalorder %s110, %s111
    %p125 = scmp.eq.s32.totalorder %s19, 3
    %p126 = por %p124, %p125
    %p128 = scmp.ne.s32.totalorder %s111, %s127
    %p129 = scmp.eq.s32.totalorder %s19, 0
    %p130 = por %p128, %p129
    %s131 = ssub.s32 %s13, %s20
    %p132 = scmp.eq.s32.totalorder %s131, 0
    %s134 = sadd.s32 %s133, 1
    %s135 = scalar_select %p132, %s133, %s134
    %p138 = pneg %p132
    %p139 = scmp.eq.s32.totalorder %s13, 3
    %p140 = por %p138, %p139
    %p141 = scmp.ne.s32.totalorder %s133, %s136
    %p142 = scmp.eq.s32.totalorder %s13, 0
    %p143 = por %p141, %p142
    %p144 = scmp.ne.s32.totalorder %s133, %s136
    %p145 = scmp.eq.s32.totalorder %s18, 3
    %p146 = por %p144, %p145
    %p147 = scmp.ne.s32.totalorder %s136, %s137
    %p148 = scmp.eq.s32.totalorder %s18, 0
    %p149 = por %p147, %p148
    %p150 = scmp.ne.s32.totalorder %s136, %s137
    %p151 = scmp.eq.s32.totalorder %s19, 3
    %p152 = por %p150, %p151
    %p154 = scmp.ne.s32.totalorder %s137, %s153
    %p155 = scmp.eq.s32.totalorder %s19, 0
    %p156 = por %p154, %p155
    %s157 = ssub.s32 %s13, %s20
    %p158 = scmp.eq.s32.totalorder %s157, 0
    %s160 = sadd.s32 %s159, 1
    %s161 = scalar_select %p158, %s159, %s160
    %p164 = pneg %p158
    %p165 = scmp.eq.s32.totalorder %s13, 3
    %p166 = por %p164, %p165
    %p167 = scmp.ne.s32.totalorder %s159, %s162
    %p168 = scmp.eq.s32.totalorder %s13, 0
    %p169 = por %p167, %p168
    %p170 = scmp.ne.s32.totalorder %s159, %s162
    %p171 = scmp.eq.s32.totalorder %s18, 3
    %p172 = por %p170, %p171
    %p173 = scmp.ne.s32.totalorder %s162, %s163
    %p174 = scmp.eq.s32.totalorder %s18, 0
    %p175 = por %p173, %p174
    %p176 = scmp.ne.s32.totalorder %s162, %s163
    %p177 = scmp.eq.s32.totalorder %s19, 3
    %p178 = por %p176, %p177
    %p180 = scmp.ne.s32.totalorder %s163, %s179
    %p181 = scmp.eq.s32.totalorder %s19, 0
    %p182 = por %p180, %p181
    %s183 = ssub.s32 %s13, %s20
    %p184 = scmp.eq.s32.totalorder %s183, 0
    %s186 = sadd.s32 %s185, 1
    %s187 = scalar_select %p184, %s185, %s186
    %p190 = pneg %p184
    %p191 = scmp.eq.s32.totalorder %s13, 3
    %p192 = por %p190, %p191
    %p193 = scmp.ne.s32.totalorder %s185, %s188
    %p194 = scmp.eq.s32.totalorder %s13, 0
    %p195 = por %p193, %p194
    %p196 = scmp.ne.s32.totalorder %s185, %s188
    %p197 = scmp.eq.s32.totalorder %s18, 3
    %p198 = por %p196, %p197
    %p199 = scmp.ne.s32.totalorder %s188, %s189
    %p200 = scmp.eq.s32.totalorder %s18, 0
    %p201 = por %p199, %p200
    %p202 = scmp.ne.s32.totalorder %s188, %s189
    %p203 = scmp.eq.s32.totalorder %s19, 3
    %p204 = por %p202, %p203
    %p206 = scmp.ne.s32.totalorder %s189, %s205
    %p207 = scmp.eq.s32.totalorder %s19, 0
    %p208 = por %p206, %p207
    %p209 = scmp.le.s32.totalorder 1, %s13
    %p210 = scmp.lt.s32.totalorder %s13, 5
    %p211 = pnand %p209, %p210
    %p212 = pneg %p211
    // Predicated region
    $region9: #{_block_forward.4} parent=5 // pred_check
      _
    $region10: #{_block_forward.4} parent=5 // pred_check_branch
      %214 = sbr.rel (%p211) target = $region12
    $region11: #{_block_forward.4} parent=5 // pred_region
      %s215 = ssub.s32 %s13, 1
      // Predicated region
      $region13: #{_block_forward.4} parent=11 // pred_check
        %p216 = pneg %p34
      $region14: #{_block_forward.4} parent=11 // pred_check_branch
        %218 = sbr.rel (%p216) target = $region16
      $region15: #{_block_forward.4} parent=11 // pred_region
        _
      $region16: #{_block_forward.4} parent=11 // pred_fallthru
        _
      // Predicated region
      $region17: #{_block_forward.4} parent=11 // pred_check
        %p219 = pneg %p55
      $region18: #{_block_forward.4} parent=11 // pred_check_branch
        %221 = sbr.rel (%p219) target = $region20
      $region19: #{_block_forward.4} parent=11 // pred_region
        _
      $region20: #{_block_forward.4} parent=11 // pred_fallthru
        _
      // Predicated region
      $region21: #{_block_forward.4} parent=11 // pred_check
        %p222 = pneg %p76
      $region22: #{_block_forward.4} parent=11 // pred_check_branch
        %224 = sbr.rel (%p222) target = $region24
      $region23: #{_block_forward.4} parent=11 // pred_region
        _
      $region24: #{_block_forward.4} parent=11 // pred_fallthru
        _
      // Predicated region
      $region25: #{_block_forward.4} parent=11 // pred_check
        %p225 = pneg %p97
      $region26: #{_block_forward.4} parent=11 // pred_check_branch
        %227 = sbr.rel (%p225) target = $region28
      $region27: #{_block_forward.4} parent=11 // pred_region
        _
      $region28: #{_block_forward.4} parent=11 // pred_fallthru
        _
    $region12: #{_block_forward.4} parent=5 // pred_fallthru
      _
    %p228 = scmp.lt.s32.totalorder %s13, 4
    // Predicated region
    $region29: #{_block_forward.4} parent=5 // pred_check
      %p229 = pneg %p228
    $region30: #{_block_forward.4} parent=5 // pred_check_branch
      %231 = sbr.rel (%p229) target = $region32
    $region31: #{_block_forward.4} parent=5 // pred_region
      // Predicated region
      $region33: #{_block_forward.4} parent=31 // pred_check
        %p232 = pneg %p117
      $region34: #{_block_forward.4} parent=31 // pred_check_branch
        %234 = sbr.rel (%p232) target = $region36
      $region35: #{_block_forward.4} parent=31 // pred_region
        %p235 = scmp.lt.s32.totalorder %s13, 3
        %s236 = scalar_select %p235, %s13, 3
        %s237 = smul.addr %s236, 2
        %s238 = smul.addr %s237, 4
        %s239 = scalar_lea.vmem %s4, %s238
      $region36: #{_block_forward.4} parent=31 // pred_fallthru
        _
      // Predicated region
      $region37: #{_block_forward.4} parent=31 // pred_check
        %p240 = pneg %p143
      $region38: #{_block_forward.4} parent=31 // pred_check_branch
        %242 = sbr.rel (%p240) target = $region40
      $region39: #{_block_forward.4} parent=31 // pred_region
        %p243 = scmp.lt.s32.totalorder %s13, 3
        %s244 = scalar_select %p243, %s13, 3
        %s245 = smul.addr %s244, 4
        %s246 = scalar_lea.vmem %s5, %s245
      $region40: #{_block_forward.4} parent=31 // pred_fallthru
        _
      // Predicated region
      $region41: #{_block_forward.4} parent=31 // pred_check
        %p247 = pneg %p169
      $region42: #{_block_forward.4} parent=31 // pred_check_branch
        %249 = sbr.rel (%p247) target = $region44
      $region43: #{_block_forward.4} parent=31 // pred_region
        %p250 = scmp.lt.s32.totalorder %s13, 3
        %s251 = scalar_select %p250, %s13, 3
        %s252 = smul.addr %s251, 4
        %s253 = scalar_lea.vmem %s6, %s252
      $region44: #{_block_forward.4} parent=31 // pred_fallthru
        _
    $region32: #{_block_forward.4} parent=5 // pred_fallthru
      _
    %p254 = scmp.le.s32.totalorder 1, %s13
    %p255 = scmp.lt.s32.totalorder %s13, 5
    %p256 = pnand %p254, %p255
    %p257 = pneg %p256
    // Predicated region
    $region45: #{_block_forward.4} parent=5 // pred_check
      _
    $region46: #{_block_forward.4} parent=5 // pred_check_branch
      %259 = sbr.rel (%p256) target = $region48
    $region47: #{_block_forward.4} parent=5 // pred_region
      %s260 = ssub.s32 %s13, 1
      %p261 = pneg %p34
      %p262 = pneg %p31
      %p263 = pneg %p55
      %p264 = pneg %p52
      %p265 = pneg %p76
      %p266 = pneg %p73
      %p267 = pneg %p97
      %p268 = pneg %p94
      %p269 = scmp.lt.s32.totalorder %s18, 3
      %s270 = scalar_select %p269, %s18, 3
      %s271 = smul.addr %s270, 2
      %s272 = smul.addr %s271, 4
      %s273 = scalar_lea.vmem %s4, %s272
      %p274 = pneg %p123
      %p275 = pneg %p120
      %p276 = scmp.lt.s32.totalorder %s18, 3
      %s277 = scalar_select %p276, %s18, 3
      %s278 = smul.addr %s277, 4
      %s279 = scalar_lea.vmem %s5, %s278
      %p280 = pneg %p149
      %p281 = pneg %p146
      %p282 = scmp.lt.s32.totalorder %s18, 3
      %s283 = scalar_select %p282, %s18, 3
      %s284 = smul.addr %s283, 4
      %s285 = scalar_lea.vmem %s6, %s284
      %p286 = pneg %p175
      %p287 = pneg %p172
      %p288 = pneg %p201
      %p289 = pneg %p198
      %p290 = scmp.lt.s32.totalorder %s18, 3
      %s291 = scalar_select %p290, %s18, 3
      %s292 = smul.addr %s291, 2
      %s293 = smul.addr %s292, 4
      %s294 = scalar_lea.vmem %s7, %s293
      %p295 = scmp.lt.s32.totalorder %s18, 3
      %s296 = scalar_select %p295, %s18, 3
      %s297 = smul.addr %s296, 2
      %s298 = smul.addr %s297, 4
      %s299 = scalar_lea.vmem %s4, %s298
      %p300 = scmp.lt.s32.totalorder %s18, 3
      %s301 = scalar_select %p300, %s18, 3
      %s302 = smul.addr %s301, 4
      %s303 = scalar_lea.vmem %s5, %s302
      %p304 = scmp.lt.s32.totalorder %s18, 3
      %s305 = scalar_select %p304, %s18, 3
      %s306 = smul.addr %s305, 4
      %s307 = scalar_lea.vmem %s6, %s306
      %p308 = scmp.lt.s32.totalorder %s18, 3
      %s309 = scalar_select %p308, %s18, 3
      %s310 = smul.addr %s309, 2
      %s311 = smul.addr %s310, 4
      %s312 = scalar_lea.vmem %s7, %s311
      %v314 = vld [vmem:[%s299] sm:$0xf]
      %v315 = vld [vmem:[%s299 + $0x4] sm:$0xf]
      %v316 = vunpack.c.l.bf16 %v314
      %v317 = vunpack.c.l.bf16 %v315
      %v318 = vld [vmem:[%s0] sm:$0xff]
      %v319 = vld [vmem:[%s0 + $0x8] sm:$0xff]
      %v320 = vld [vmem:[%s1] sm:$0xff]
      %v321 = vld [vmem:[%s1 + $0x8] sm:$0xff]
      %324 = vrot.lane.b32.xlu0 %v316, 124
      %v325 = vpop.permute.xlu0 %324
      %326 = vrot.lane.b32.xlu0 %v317, 124
      %v327 = vpop.permute.xlu0 %326
      %330 = vrot.lane.b32.xlu0 %v316, 4
      %v331 = vpop.permute.xlu0 %330
      %332 = vrot.lane.b32.xlu0 %v317, 4
      %v333 = vpop.permute.xlu0 %332
      %vm336 = vcmask 31744
      %v337 = vsel %vm336, %v325, %v331
      %v338 = vsel %vm336, %v327, %v333
      %v339 = vmul.f32 %v316, %v318
      %v340 = vmul.f32 %v317, %v319
      %v341 = vmul.f32 %v337, %v320
      %v342 = vmul.f32 %v338, %v321
      %v343 = vadd.f32 %v339, %v341
      %v344 = vadd.f32 %v340, %v342
      %v345 = vld [vmem:[%s303] sm:$0xf]
      %v346 = vunpack.c.l.bf16 %v345
      %v347 = vld [vmem:[%s2] sm:$0xff]
      %v348 = vld [vmem:[%s3] sm:$0xff]
      %350 = vrot.lane.b32.xlu0 %v346, 124
      %v351 = vpop.permute.xlu0 %350
      %353 = vrot.lane.b32.xlu0 %v346, 4
      %v354 = vpop.permute.xlu0 %353
      %v356 = vsel %vm336, %v351, %v354
      %v357 = vmul.f32 %v346, %v347
      %v358 = vmul.f32 %v356, %v348
      %v359 = vadd.f32 %v357, %v358
      %v360 = vpack.c.bf16 %v344, %v343
      %v361 = vpack.c.bf16 %v359, %v359
      %vm362 = vcmask 64512
      %v364 = vsel %vm362, %v360, 0
      %v367 = vsel %vm362, %v361, 0
      %369 = vmatprep.subr.bf16.mxu0 0
      %370 = vmatpush1.bf16.xpose.msra.mxu0 %v367
      %371 = vmatprep.subr.bf16.mxu0 0
      %372 = vmatpush1.bf16.xpose.msra.mxu0 0
      %373 = vmatprep.subr.bf16.mxu0 0
      %374 = vmatpush1.bf16.xpose.msra.mxu0 0
      %375 = vmatprep.subr.bf16.mxu0 0
      %376 = vmatpush1.bf16.xpose.msra.mxu0 0
      %377 = vmatprep.subr.bf16.mxu0 0
      %378 = vmatpush1.bf16.xpose.msra.mxu0 0
      %379 = vmatprep.subr.bf16.mxu0 0
      %380 = vmatpush1.bf16.xpose.msra.mxu0 0
      %381 = vmatprep.subr.bf16.mxu0 0
      %382 = vmatpush1.bf16.xpose.msra.mxu0 0
      %383 = vmatprep.subr.bf16.mxu0 0
      %384 = vmatpush1.bf16.xpose.msra.mxu0 0
      %385 = vmatprep.subr.bf16.mxu0 0
      %386 = vmatpush1.bf16.xpose.msra.mxu0 0
      %387 = vmatprep.subr.bf16.mxu0 0
      %388 = vmatpush1.bf16.xpose.msra.mxu0 0
      %389 = vmatprep.subr.bf16.mxu0 0
      %390 = vmatpush1.bf16.xpose.msra.mxu0 0
      %391 = vmatprep.subr.bf16.mxu0 0
      %392 = vmatpush1.bf16.xpose.msra.mxu0 0
      %393 = vmatprep.subr.bf16.mxu0 0
      %394 = vmatpush1.bf16.xpose.msra.mxu0 0
      %395 = vmatprep.subr.bf16.mxu0 0
      %396 = vmatpush1.bf16.xpose.msra.mxu0 0
      %397 = vmatprep.subr.bf16.mxu0 0
      %398 = vmatpush1.bf16.xpose.msra.mxu0 0
      %399 = vmatprep.subr.bf16.mxu0 0
      %400 = vmatpush1.bf16.xpose.msra.mxu0 0
      %401 = vmatprep.mubr.bf16.mxu0 0
      %402 = vmatmul.mubr.bf16.gmra.mrb[0].mxu0 %v364
      %v403 = vpop.f32.mrb[0].mxu0
      %v404 = vadd.f32 0.0, %v403
      %v405 = vpop.f32.mrb[0].mxu0
      %v406 = vpop.f32.mrb[0].mxu0
      %v407 = vadd.f32 0.0, %v406
      %v408 = vpop.f32.mrb[0].mxu0
      %409 = vdwg.mxu0
      %v410 = vlaneseq
      %v411 = vshrl.u32 %v410, 7
      %v412 = vlaneseq
      %v413 = vand.u32 %v412, 127
      %vm414 = vcmp.ge.s32.totalorder %v411, %v413
      %v415 = vsel %vm414, 1, 0
      %vm416 = vcmp.eq.s32.totalorder %v415, 1
      %v417 = vsel %vm416, %v404, -1e+30
      %v418 = vsel %vm416, %v407, -1e+30
      %v419 = vsel %vm362, %v417, -inf
      %420 = vmax.xlane.f32.xlu0 %v419
      %v421 = vpop.xlane.xlu0 %420
      %v422 = vsel %vm362, %v418, -inf
      %423 = vmax.xlane.f32.xlu0 %v422
      %v424 = vpop.xlane.xlu0 %423
      %v425 = vsub.f32 %v417, %v421
      %v426 = vsub.f32 %v418, %v424
      %v427 = vmul.f32 %v425, 1.442695
      %v428 = vpow.pop %v427
      %v429 = vmul.f32 %v426, 1.442695
      %v430 = vpow.pop %v429
      %v431 = vsel %vm362, %v428, 0.0
      %432 = vadd.xlane.f32.xlu0 %v431
      %v433 = vpop.xlane.xlu0 %432
      %v434 = vsel %vm362, %v430, 0.0
      %435 = vadd.xlane.f32.xlu0 %v434
      %v436 = vpop.xlane.xlu0 %435
      %v437 = vrcp.pop %v433
      %v438 = vrcp.pop %v436
      %v439 = vpack.c.bf16 %v430, %v428
      %v440 = vld [vmem:[%s307] sm:$0xf]
      %v442 = vsel %vm362, %v439, 0
      %vm444 = vcmask 1043456
      %v446 = vsel %vm444, %v440, 0
      %448 = vmatprep.subr.bf16.mxu0 0
      %449 = vmatpush1.bf16.msra.mxu0 %v446
      %450 = vmatprep.subr.bf16.mxu0 0
      %451 = vmatpush1.bf16.msra.mxu0 0
      %452 = vmatprep.subr.bf16.mxu0 0
      %453 = vmatpush1.bf16.msra.mxu0 0
      %454 = vmatprep.subr.bf16.mxu0 0
      %455 = vmatpush1.bf16.msra.mxu0 0
      %456 = vmatprep.subr.bf16.mxu0 0
      %457 = vmatpush1.bf16.msra.mxu0 0
      %458 = vmatprep.subr.bf16.mxu0 0
      %459 = vmatpush1.bf16.msra.mxu0 0
      %460 = vmatprep.subr.bf16.mxu0 0
      %461 = vmatpush1.bf16.msra.mxu0 0
      %462 = vmatprep.subr.bf16.mxu0 0
      %463 = vmatpush1.bf16.msra.mxu0 0
      %464 = vmatprep.subr.bf16.mxu0 0
      %465 = vmatpush1.bf16.msra.mxu0 0
      %466 = vmatprep.subr.bf16.mxu0 0
      %467 = vmatpush1.bf16.msra.mxu0 0
      %468 = vmatprep.subr.bf16.mxu0 0
      %469 = vmatpush1.bf16.msra.mxu0 0
      %470 = vmatprep.subr.bf16.mxu0 0
      %471 = vmatpush1.bf16.msra.mxu0 0
      %472 = vmatprep.subr.bf16.mxu0 0
      %473 = vmatpush1.bf16.msra.mxu0 0
      %474 = vmatprep.subr.bf16.mxu0 0
      %475 = vmatpush1.bf16.msra.mxu0 0
      %476 = vmatprep.subr.bf16.mxu0 0
      %477 = vmatpush1.bf16.msra.mxu0 0
      %478 = vmatprep.subr.bf16.mxu0 0
      %479 = vmatpush1.bf16.msra.mxu0 0
      %480 = vmatprep.mubr.bf16.mxu0 0
      %481 = vmatmul.mubr.bf16.gmra.mrb[0].mxu0 %v442
      %v482 = vpop.f32.mrb[0].mxu0
      %v483 = vadd.f32 0.0, %v482
      %v484 = vpop.f32.mrb[0].mxu0
      %v485 = vpop.f32.mrb[0].mxu0
      %v486 = vadd.f32 0.0, %v485
      %v487 = vpop.f32.mrb[0].mxu0
      %488 = vdwg.mxu0
      %v489 = vmul.f32 %v483, %v437
      %v490 = vmul.f32 %v486, %v438
      %v491 = vpack.c.bf16 %v490, %v489
      %v493 = vunpack.c.l.b16 %v491
      %v494 = vunpack.c.h.b16 %v491
      %v495 = vpack.c.b16 %v493, %v493
      %v496 = vpack.c.b16 %v494, %v494
      %vm499 = vcmask 60416
      %500 = vst.msk [vmem:[%s312] sm:$0xf] %vm499, %v495
      %501 = vst.msk [vmem:[%s312 + $0x4] sm:$0xf] %vm499, %v496
      %p502 = scmp.lt.s32.totalorder %s18, 3
      %s503 = scalar_select %p502, %s18, 3
      %s504 = smul.addr %s503, 2
      %s505 = smul.addr %s504, 4
      %s506 = scalar_lea.vmem %s7, %s505
      // Predicated region
      $region49: #{_block_forward.4} parent=47 // pred_check
        %p507 = pneg %p198
      $region50: #{_block_forward.4} parent=47 // pred_check_branch
        %509 = sbr.rel (%p507) target = $region52
      $region51: #{_block_forward.4} parent=47 // pred_region
        _
      $region52: #{_block_forward.4} parent=47 // pred_fallthru
        _
    $region48: #{_block_forward.4} parent=5 // pred_fallthru
      _
    %p510 = scmp.le.s32.totalorder 2, %s13
    // Predicated region
    $region53: #{_block_forward.4} parent=5 // pred_check
      %p511 = pneg %p510
    $region54: #{_block_forward.4} parent=5 // pred_check_branch
      %513 = sbr.rel (%p511) target = $region56
    $region55: #{_block_forward.4} parent=5 // pred_region
      %s514 = ssub.s32 %s13, 2
      // Predicated region
      $region57: #{_block_forward.4} parent=55 // pred_check
        %p515 = pneg %p204
      $region58: #{_block_forward.4} parent=55 // pred_check_branch
        %517 = sbr.rel (%p515) target = $region60
      $region59: #{_block_forward.4} parent=55 // pred_region
        %p518 = scmp.lt.s32.totalorder %s19, 3
        %s519 = scalar_select %p518, %s19, 3
        %s520 = smul.addr %s519, 2
        %s521 = smul.addr %s520, 4
        %s522 = scalar_lea.vmem %s7, %s521
      $region60: #{_block_forward.4} parent=55 // pred_fallthru
        _
    $region56: #{_block_forward.4} parent=5 // pred_fallthru
      _
  $region6: #{_block_forward.4} parent=0 // loop_footer
    %s17 = sadd.s32 1, %s13
  $region7: #{_block_forward.4} parent=0 // loop_footer_branch
    %12 = sbr.rel target = $region3
  $region8: #{_block_forward.4} parent=0 // loop_exit
    _

// kernel: _block_forward.5
$region0: #{_block_forward.5}
  #allocation0 [shape = 'u32[]', space=smem, size = 0x4, offset = 0x4, fixed_abs, tag = 'smem constant byte address 0x4 - core index']
  #allocation1 [shape = 'u32[144,128]{1,0:T(1,128)}', space=vmem, size = 0x12000, scoped, tag = 'internal scratch']
  %s0 = inlined_call_operand.vmem [shape: f32[16,32], index: 0, kind: input, shape index: {}]
  %s1 = inlined_call_operand.vmem [shape: bf16[16,32], index: 1, kind: input, shape index: {}]
  %s2 = inlined_call_operand.vmem [shape: bf16[32,32], index: 2, kind: input, shape index: {}]
  %s3 = inlined_call_operand.vmem [shape: f32[1,32], index: 3, kind: input, shape index: {}]
  %s4 = inlined_call_operand.vmem [shape: bf16[32,128], index: 4, kind: input, shape index: {}]
  %s5 = inlined_call_operand.vmem [shape: bf16[64,32], index: 5, kind: input, shape index: {}]
  %s6 = inlined_call_operand.hbm [shape: f32[16,32], index: 6, kind: output, shape index: {}]
  %s7 = sld [smem:[#allocation0]]
  $region34: #{_block_forward.5} parent=0
    _
  %s9 = ssub.s32 1, %s7
  %s10 = scalar_select 0, %s9, %s7
  $region1: #{_block_forward.5} parent=0
    #allocation2 [shape = 'u8[8192]{0}', space=vmem, size = 0x2000, scoped, tag = 'output window, operand 0, single buffered']
    #allocation3 [shape = 's32[1]{0}', space=sflag, size = 0x4, scoped, tag = 'scoped memory for _block_forward.5']
    %11 = vsyncpa [#allocation3], 0
    // Predicated region
    $region2: #{_block_forward.5} parent=1 // pred_check
      _
    $region3: #{_block_forward.5} parent=1 // pred_check_branch
      %13 = sbr.rel (0) target = $region5
    $region4: #{_block_forward.5} parent=1 // pred_region
      _
    $region5: #{_block_forward.5} parent=1 // pred_fallthru
      _
    // Predicated region
    $region6: #{_block_forward.5} parent=1 // pred_check
      _
    $region7: #{_block_forward.5} parent=1 // pred_check_branch
      %15 = sbr.rel (0) target = $region9
    $region8: #{_block_forward.5} parent=1 // pred_region
      _
    $region9: #{_block_forward.5} parent=1 // pred_fallthru
      _
    // Predicated region
    $region10: #{_block_forward.5} parent=1 // pred_check
      _
    $region11: #{_block_forward.5} parent=1 // pred_check_branch
      %17 = sbr.rel (0) target = $region13
    $region12: #{_block_forward.5} parent=1 // pred_region
      _
    $region13: #{_block_forward.5} parent=1 // pred_fallthru
      _
    // Predicated region
    $region14: #{_block_forward.5} parent=1 // pred_check
      _
    $region15: #{_block_forward.5} parent=1 // pred_check_branch
      %19 = sbr.rel (0) target = $region17
    $region16: #{_block_forward.5} parent=1 // pred_region
      _
    $region17: #{_block_forward.5} parent=1 // pred_fallthru
      _
    // Predicated region
    $region18: #{_block_forward.5} parent=1 // pred_check
      _
    $region19: #{_block_forward.5} parent=1 // pred_check_branch
      %21 = sbr.rel (0) target = $region21
    $region20: #{_block_forward.5} parent=1 // pred_region
      _
    $region21: #{_block_forward.5} parent=1 // pred_fallthru
      _
    // Predicated region
    $region22: #{_block_forward.5} parent=1 // pred_check
      _
    $region23: #{_block_forward.5} parent=1 // pred_check_branch
      %23 = sbr.rel (0) target = $region25
    $region24: #{_block_forward.5} parent=1 // pred_region
      _
    $region25: #{_block_forward.5} parent=1 // pred_fallthru
      _
    %v25 = vld [vmem:[%s0] sm:$0xff]
    %v26 = vld [vmem:[%s0 + $0x8] sm:$0xff]
    %v27 = vld [vmem:[%s1] sm:$0xf]
    %v28 = vld [vmem:[%s1 + $0x4] sm:$0xf]
    %v29 = vld [vmem:[%s2] sm:$0xf]
    %v30 = vld [vmem:[%s2 + $0x4] sm:$0xf]
    %v31 = vld [vmem:[%s2 + $0x8] sm:$0xf]
    %v32 = vld [vmem:[%s2 + $0xc] sm:$0xf]
    %v35 = vunpack.c.l.b16 %v27
    %v36 = vunpack.c.l.b16 %v28
    %v37 = vpack.c.b16 %v36, %v35
    %v42 = vunpack.c.l.b16 %v29
    %v43 = vunpack.c.l.b16 %v30
    %v44 = vunpack.c.l.b16 %v31
    %v45 = vunpack.c.l.b16 %v32
    %v46 = vpack.c.b16 %v43, %v42
    %v47 = vpack.c.b16 %v45, %v44
    %vm50 = vcmask 261120
    %v52 = vsel %vm50, %v37, 0
    %54 = vmatprep.subr.bf16.mxu0 0
    %55 = vmatpush1.bf16.msra.mxu0 %v46
    %56 = vmatprep.subr.bf16.mxu0 0
    %57 = vmatpush1.bf16.msra.mxu0 %v47
    %58 = vmatprep.subr.bf16.mxu0 0
    %59 = vmatpush1.bf16.msra.mxu0 0
    %60 = vmatprep.subr.bf16.mxu0 0
    %61 = vmatpush1.bf16.msra.mxu0 0
    %62 = vmatprep.subr.bf16.mxu0 0
    %63 = vmatpush1.bf16.msra.mxu0 0
    %64 = vmatprep.subr.bf16.mxu0 0
    %65 = vmatpush1.bf16.msra.mxu0 0
    %66 = vmatprep.subr.bf16.mxu0 0
    %67 = vmatpush1.bf16.msra.mxu0 0
    %68 = vmatprep.subr.bf16.mxu0 0
    %69 = vmatpush1.bf16.msra.mxu0 0
    %70 = vmatprep.subr.bf16.mxu0 0
    %71 = vmatpush1.bf16.msra.mxu0 0
    %72 = vmatprep.subr.bf16.mxu0 0
    %73 = vmatpush1.bf16.msra.mxu0 0
    %74 = vmatprep.subr.bf16.mxu0 0
    %75 = vmatpush1.bf16.msra.mxu0 0
    %76 = vmatprep.subr.bf16.mxu0 0
    %77 = vmatpush1.bf16.msra.mxu0 0
    %78 = vmatprep.subr.bf16.mxu0 0
    %79 = vmatpush1.bf16.msra.mxu0 0
    %80 = vmatprep.subr.bf16.mxu0 0
    %81 = vmatpush1.bf16.msra.mxu0 0
    %82 = vmatprep.subr.bf16.mxu0 0
    %83 = vmatpush1.bf16.msra.mxu0 0
    %84 = vmatprep.subr.bf16.mxu0 0
    %85 = vmatpush1.bf16.msra.mxu0 0
    %86 = vmatprep.mubr.bf16.mxu0 0
    %87 = vmatmul.mubr.bf16.gmra.mrb[0].mxu0 %v52
    %v88 = vpop.f32.mrb[0].mxu0
    %v89 = vadd.f32 0.0, %v88
    %v90 = vpop.f32.mrb[0].mxu0
    %v91 = vpop.f32.mrb[0].mxu0
    %v92 = vadd.f32 0.0, %v91
    %v93 = vpop.f32.mrb[0].mxu0
    %94 = vdwg.mxu0
    %v95 = vadd.f32 %v25, %v89
    %v96 = vadd.f32 %v26, %v92
    %v97 = vmul.f32 %v95, %v95
    %v98 = vmul.f32 %v96, %v96
    %v99 = vsel %vm50, %v97, 0.0
    %100 = vadd.xlane.f32.xlu0 %v99
    %v101 = vpop.xlane.xlu0 %100
    %v102 = vsel %vm50, %v98, 0.0
    %103 = vadd.xlane.f32.xlu0 %v102
    %v104 = vpop.xlane.xlu0 %103
    %v105 = vrcp.pop 32.0
    %v106 = vmul.f32 %v101, %v105
    %v107 = vmul.f32 %v104, %v105
    %v108 = vadd.f32 %v106, 1e-05
    %v109 = vadd.f32 %v107, 1e-05
    %v110 = vrsqrt.pop %v108
    %v111 = vrsqrt.pop %v109
    %v112 = vmul.f32 %v95, %v110
    %v113 = vmul.f32 %v96, %v111
    %v114 = vld [vmem:[%s3] sm:$0x1]
    %v116 = vlaneseq
    %v117 = vshrl.u32 %v116, 7
    %v118 = vsub.s32 0, %v117
    %v119 = vrot.slane %v114, %v118
    %v121 = vmul.f32 %v112, %v119
    %v122 = vmul.f32 %v113, %v119
    %v123 = vpack.c.bf16 %v122, %v121
    %v124 = vld [vmem:[%s4] sm:$0xf]
    %v125 = vld [vmem:[%s4 + $0x4] sm:$0xf]
    %v126 = vld [vmem:[%s4 + $0x8] sm:$0xf]
    %v127 = vld [vmem:[%s4 + $0xc] sm:$0xf]
    %v132 = vunpack.c.l.b16 %v124
    %v133 = vunpack.c.l.b16 %v125
    %v134 = vunpack.c.l.b16 %v126
    %v135 = vunpack.c.l.b16 %v127
    %v136 = vpack.c.b16 %v133, %v132
    %v137 = vpack.c.b16 %v135, %v134
    %v141 = vsel %vm50, %v123, 0
    %143 = vmatprep.subr.bf16.mxu0 0
    %144 = vmatpush1.bf16.msra.mxu0 %v136
    %145 = vmatprep.subr.bf16.mxu0 0
    %146 = vmatpush1.bf16.msra.mxu0 %v137
    %147 = vmatprep.subr.bf16.mxu0 0
    %148 = vmatpush1.bf16.msra.mxu0 0
    %149 = vmatprep.subr.bf16.mxu0 0
    %150 = vmatpush1.bf16.msra.mxu0 0
    %151 = vmatprep.subr.bf16.mxu0 0
    %152 = vmatpush1.bf16.msra.mxu0 0
    %153 = vmatprep.subr.bf16.mxu0 0
    %154 = vmatpush1.bf16.msra.mxu0 0
    %155 = vmatprep.subr.bf16.mxu0 0
    %156 = vmatpush1.bf16.msra.mxu0 0
    %157 = vmatprep.subr.bf16.mxu0 0
    %158 = vmatpush1.bf16.msra.mxu0 0
    %159 = vmatprep.subr.bf16.mxu0 0
    %160 = vmatpush1.bf16.msra.mxu0 0
    %161 = vmatprep.subr.bf16.mxu0 0
    %162 = vmatpush1.bf16.msra.mxu0 0
    %163 = vmatprep.subr.bf16.mxu0 0
    %164 = vmatpush1.bf16.msra.mxu0 0
    %165 = vmatprep.subr.bf16.mxu0 0
    %166 = vmatpush1.bf16.msra.mxu0 0
    %167 = vmatprep.subr.bf16.mxu0 0
    %168 = vmatpush1.bf16.msra.mxu0 0
    %169 = vmatprep.subr.bf16.mxu0 0
    %170 = vmatpush1.bf16.msra.mxu0 0
    %171 = vmatprep.subr.bf16.mxu0 0
    %172 = vmatpush1.bf16.msra.mxu0 0
    %173 = vmatprep.subr.bf16.mxu0 0
    %174 = vmatpush1.bf16.msra.mxu0 0
    %175 = vmatprep.mubr.bf16.mxu0 0
    %176 = vmatmul.mubr.bf16.gmra.mrb[0].mxu0 %v141
    %v177 = vpop.f32.mrb[0].mxu0
    %v178 = vadd.f32 0.0, %v177
    %v179 = vpop.f32.mrb[0].mxu0
    %v180 = vpop.f32.mrb[0].mxu0
    %v181 = vadd.f32 0.0, %v180
    %v182 = vpop.f32.mrb[0].mxu0
    %183 = vdwg.mxu0
    %v184 = vxor.u32 %v178, 2147483648
    %v185 = vxor.u32 %v181, 2147483648
    %v186 = vmul.f32 %v184, 1.442695
    %v187 = vpow.pop %v186
    %v188 = vmul.f32 %v185, 1.442695
    %v189 = vpow.pop %v188
    %v190 = vadd.f32 %v187, 1.0
    %v191 = vadd.f32 %v189, 1.0
    %v192 = vrcp.pop %v190
    %v193 = vmul.f32 1.0, %v192
    %v194 = vrcp.pop %v191
    %v195 = vmul.f32 1.0, %v194
    %v196 = vmul.f32 %v178, %v193
    %v197 = vmul.f32 %v181, %v195
    %200 = vrot.lane.b32.xlu0 %v178, 64
    %v201 = vpop.permute.xlu0 %200
    %202 = vrot.lane.b32.xlu0 %v181, 64
    %v203 = vpop.permute.xlu0 %202
    %v206 = vmul.f32 %v196, %v201
    %v207 = vmul.f32 %v197, %v203
    %v208 = vpack.c.bf16 %v207, %v206
    %v209 = vld [vmem:[%s5] sm:$0xf]
    %v210 = vld [vmem:[%s5 + $0x4] sm:$0xf]
    %v211 = vld [vmem:[%s5 + $0x8] sm:$0xf]
    %v212 = vld [vmem:[%s5 + $0xc] sm:$0xf]
    %v213 = vld [vmem:[%s5 + $0x10] sm:$0xf]
    %v214 = vld [vmem:[%s5 + $0x14] sm:$0xf]
    %v215 = vld [vmem:[%s5 + $0x18] sm:$0xf]
    %v216 = vld [vmem:[%s5 + $0x1c] sm:$0xf]
    %v225 = vunpack.c.l.b16 %v209
    %v226 = vunpack.c.l.b16 %v210
    %v227 = vunpack.c.l.b16 %v211
    %v228 = vunpack.c.l.b16 %v212
    %v229 = vunpack.c.l.b16 %v213
    %v230 = vunpack.c.l.b16 %v214
    %v231 = vunpack.c.l.b16 %v215
    %v232 = vunpack.c.l.b16 %v216
    %v233 = vpack.c.b16 %v226, %v225
    %v234 = vpack.c.b16 %v228, %v227
    %v235 = vpack.c.b16 %v230, %v229
    %v236 = vpack.c.b16 %v232, %v231
    %vm241 = vcmask 523264
    %v243 = vsel %vm241, %v208, 0
    %245 = vmatprep.subr.bf16.mxu0 0
    %246 = vmatpush1.bf16.msra.mxu0 %v233
    %247 = vmatprep.subr.bf16.mxu0 0
    %248 = vmatpush1.bf16.msra.mxu0 %v234
    %249 = vmatprep.subr.bf16.mxu0 0
    %250 = vmatpush1.bf16.msra.mxu0 %v235
    %251 = vmatprep.subr.bf16.mxu0 0
    %252 = vmatpush1.bf16.msra.mxu0 %v236
    %253 = vmatprep.subr.bf16.mxu0 0
    %254 = vmatpush1.bf16.msra.mxu0 0
    %255 = vmatprep.subr.bf16.mxu0 0
    %256 = vmatpush1.bf16.msra.mxu0 0
    %257 = vmatprep.subr.bf16.mxu0 0
    %258 = vmatpush1.bf16.msra.mxu0 0
    %259 = vmatprep.subr.bf16.mxu0 0
    %260 = vmatpush1.bf16.msra.mxu0 0
    %261 = vmatprep.subr.bf16.mxu0 0
    %262 = vmatpush1.bf16.msra.mxu0 0
    %263 = vmatprep.subr.bf16.mxu0 0
    %264 = vmatpush1.bf16.msra.mxu0 0
    %265 = vmatprep.subr.bf16.mxu0 0
    %266 = vmatpush1.bf16.msra.mxu0 0
    %267 = vmatprep.subr.bf16.mxu0 0
    %268 = vmatpush1.bf16.msra.mxu0 0
    %269 = vmatprep.subr.bf16.mxu0 0
    %270 = vmatpush1.bf16.msra.mxu0 0
    %271 = vmatprep.subr.bf16.mxu0 0
    %272 = vmatpush1.bf16.msra.mxu0 0
    %273 = vmatprep.subr.bf16.mxu0 0
    %274 = vmatpush1.bf16.msra.mxu0 0
    %275 = vmatprep.subr.bf16.mxu0 0
    %276 = vmatpush1.bf16.msra.mxu0 0
    %277 = vmatprep.mubr.bf16.mxu0 0
    %278 = vmatmul.mubr.bf16.gmra.mrb[0].mxu0 %v243
    %v279 = vpop.f32.mrb[0].mxu0
    %v280 = vadd.f32 0.0, %v279
    %v281 = vpop.f32.mrb[0].mxu0
    %v282 = vpop.f32.mrb[0].mxu0
    %v283 = vadd.f32 0.0, %v282
    %v284 = vpop.f32.mrb[0].mxu0
    %285 = vdwg.mxu0
    %v286 = vadd.f32 %v95, %v280
    %v287 = vadd.f32 %v96, %v283
    %288 = vst.msk [vmem:[#allocation2] sm:$0xff] %vm50, %v286
    %289 = vst.msk [vmem:[#allocation2 + $0x8] sm:$0xff] %vm50, %v287
    // Predicated region
    $region26: #{_block_forward.5} parent=1 // pred_check
      _
    $region27: #{_block_forward.5} parent=1 // pred_check_branch
      %291 = sbr.rel (0) target = $region29
    $region28: #{_block_forward.5} parent=1 // pred_region
      %s293 = ssub.s32 256, 256
      %294 = vsyncadd [#allocation3], %s293
      %s295 = sshll.u32 [#allocation2], 4
      %s296 = int_to_ptr.vmem [resolvable:$true] %s295
      %301 = dma.vmem_to_hbm [thread:$0]  %s296, 256, %s6, [#allocation3], 128, 128, 8
    $region29: #{_block_forward.5} parent=1 // pred_fallthru
      _
    // Predicated region
    $region30: #{_block_forward.5} parent=1 // pred_check
      _
    $region31: #{_block_forward.5} parent=1 // pred_check_branch
      %303 = sbr.rel (0) target = $region33
    $region32: #{_block_forward.5} parent=1 // pred_region
      %304 = dma.done [#allocation3], 256
    $region33: #{_block_forward.5} parent=1 // pred_fallthru
      _
    %305 = vsyncpa [#allocation3], 1

</llo_original>
